<compile_context>
chip_gen: v7x
topology: tpu7x:2x2x1
jax: 0.10.0
libtpu: 0.0.40
codegen_flags: <defaults>
</compile_context>

<pallas_src>
import jax
import jax.numpy as jnp
from jax import lax
from jax.experimental import pallas as pl
from jax.experimental.pallas import tpu as pltpu

_LANES = 512            # lane-dense slab width (multiple of 128)
_MAX_BLOCK_ROWS = 256   # rows per grid step (multiple of 8) -> 512 KiB f32 block
_INV_2_24 = 1.0 / 16777216.0
_TWO_PI = 6.283185307179586

_PHI = 0x9E3779B9
_M1 = 0x7FEB352D
_M2 = 0x846CA68B


def _mix32(h):
    """lowbias32 avalanche mix: uint32 -> uint32 (pure VPU int ops)."""
    h = h ^ (h >> 16)
    h = h * jnp.uint32(_M1)
    h = h ^ (h >> 15)
    h = h * jnp.uint32(_M2)
    h = h ^ (h >> 16)
    return h


def _uniform_open01(bits):
    """uint32 bits -> float32 uniform in (0, 1); never exactly 0 or 1."""
    top24 = (bits >> 8).astype(jnp.int32)            # values in [0, 2^24)
    return (top24.astype(jnp.float32) + 0.5) * _INV_2_24


def _gaussian_noise_kernel(seed_ref, sigma_ref, x_ref, o_ref):
    bm, bw = x_ref.shape
    half = bw // 2

    # ---- counter-based RNG: one unique uint32 counter per Box-Muller pair ----
    pid = pl.program_id(0).astype(jnp.uint32)
    row = lax.broadcasted_iota(jnp.int32, (bm, half), 0).astype(jnp.uint32)
    col = lax.broadcasted_iota(jnp.int32, (bm, half), 1).astype(jnp.uint32)
    ctr = (pid * jnp.uint32(bm) + row) * jnp.uint32(half) + col

    seed = seed_ref[0].astype(jnp.uint32)
    h1 = _mix32(ctr ^ (seed * jnp.uint32(_PHI)))
    h2 = _mix32(h1 + jnp.uint32(_PHI))

    u1 = _uniform_open01(h1)
    u2 = _uniform_open01(h2)

    # ---- Box-Muller, using both outputs: cos -> left half, sin -> right half ----
    r = jnp.sqrt(-2.0 * jnp.log(u1))
    theta = _TWO_PI * u2
    z = jnp.concatenate([r * jnp.cos(theta), r * jnp.sin(theta)], axis=-1)

    sigma = sigma_ref[0]
    x = x_ref[...].astype(jnp.float32)
    # x + (sigma * x) * z  ==  x * (1 + sigma * z)
    o_ref[...] = (x * (1.0 + sigma * z)).astype(o_ref.dtype)


def gaussian_noise(x, seed, *, sigma=0.1, training=True):
    """Pallas implementation of helperFn.GaussianNoise.forward."""
    if (not training) or sigma == 0:
        return x  # identity, exactly like the PyTorch module in eval mode

    orig_shape = x.shape
    orig_dtype = x.dtype

    flat = x.reshape(-1)
    n = flat.shape[0]
    pad = (-n) % _LANES
    if pad:  # only for awkward sizes; typical NCHW sizes hit the no-pad path
        flat = jnp.pad(flat, (0, pad))
    rows = flat.shape[0] // _LANES
    x2d = flat.reshape(rows, _LANES)

    block_rows = rows if rows <= _MAX_BLOCK_ROWS else _MAX_BLOCK_ROWS
    grid = (pl.cdiv(rows, block_rows),)

    seed_arr = jnp.asarray([seed], dtype=jnp.int32)
    sigma_arr = jnp.asarray([sigma], dtype=jnp.float32)

    out2d = pl.pallas_call(
        _gaussian_noise_kernel,
        out_shape=jax.ShapeDtypeStruct(x2d.shape, x2d.dtype),
        grid=grid,
        in_specs=[
            pl.BlockSpec(memory_space=pltpu.MemorySpace.SMEM),   # seed scalar
            pl.BlockSpec(memory_space=pltpu.MemorySpace.SMEM),   # sigma scalar
            pl.BlockSpec((block_rows, _LANES), lambda i: (i, 0)),
        ],
        out_specs=pl.BlockSpec((block_rows, _LANES), lambda i: (i, 0)),
        compiler_params=pltpu.CompilerParams(
            dimension_semantics=("parallel",)),
    )(seed_arr, sigma_arr, x2d)

    if pad:
        out = out2d.reshape(-1)[:n].reshape(orig_shape)
    else:
        out = out2d.reshape(orig_shape)
    return out.astype(orig_dtype)


if __name__ == "__main__":
    key = jax.random.PRNGKey(0)
    # NCHW input, same convention as the PyTorch module.
    x = jax.random.normal(key, (2, 4, 16, 16), dtype=jnp.float32)

    sigma = 0.1
    out = jax.block_until_ready(gaussian_noise(x, seed=0, sigma=sigma, training=True))

    assert out.shape == x.shape and out.dtype == x.dtype
    assert bool(jnp.isfinite(out).all())

    # out = x * (1 + sigma * z)  =>  relative perturbation bounded by sigma*|z|.
    rel = jnp.abs(out - x) / (jnp.abs(x) + 1e-12)
    assert float(jnp.max(rel)) < 6.0 * sigma  # |z| < 6 w.h.p.

    # Recovered z should look standard-normal (away from tiny x).
    mask = jnp.abs(x) > 0.1
    z_est = jnp.where(mask, (out - x) / (sigma * x), 0.0)
    cnt = jnp.sum(mask).astype(jnp.float32)
    mean = jnp.sum(z_est) / cnt
    var = jnp.sum(jnp.where(mask, (z_est - mean) ** 2, 0.0)) / cnt
    assert abs(float(mean)) < 0.25
    assert 0.75 < float(var) ** 0.5 < 1.25

    # Deterministic for a fixed seed.
    out2 = jax.block_until_ready(gaussian_noise(x, seed=0, sigma=sigma, training=True))
    assert bool(jnp.array_equal(out, out2))

    # Eval-mode path is an exact identity.
    out_eval = jax.block_until_ready(
        gaussian_noise(x, seed=0, sigma=sigma, training=False))
    assert bool(jnp.array_equal(out_eval, x))

    print("KERNEL_OK")
</pallas_src>

<mosaic_0001>
module attributes {stable_mosaic.version = 11 : i64} {
  func.func @_gaussian_noise_kernel(%arg0: i32, %arg1: memref<1xi32, #tpu.memory_space<smem>>, %arg2: memref<1xf32, #tpu.memory_space<smem>>, %arg3: memref<4x512xf32, #tpu.memory_space<vmem>>, %arg4: memref<4x512xf32, #tpu.memory_space<vmem>>) attributes {dimension_semantics = [#tpu.dimension_semantics<parallel>], iteration_bounds = array<i64: 1>, scalar_prefetch = 0 : i64, scratch_operands = 0 : i64, tpu.core_type = #tpu.core_type<tc>, window_params = [{transform_indices = @transform_0, window_bounds = array<i64: 1>}, {transform_indices = @transform_1, window_bounds = array<i64: 1>}, {transform_indices = @transform_2, window_bounds = array<i64: 4, 512>}, {transform_indices = @transform_3, window_bounds = array<i64: 4, 512>}]} {
    %0 = tpu.iota {dimensions = array<i32: 0>} : vector<4x256xi32>
    %1 = tpu.iota {dimensions = array<i32: 1>} : vector<4x256xi32>
    %c4_i32 = arith.constant 4 : i32
    %2 = arith.muli %arg0, %c4_i32 : i32
    %3 = vector.broadcast %2 : i32 to vector<4x256xi32>
    %4 = arith.addi %3, %0 : vector<4x256xi32>
    %c256_i32 = arith.constant 256 : i32
    %5 = vector.broadcast %c256_i32 : i32 to vector<4x256xi32>
    %6 = arith.muli %4, %5 : vector<4x256xi32>
    %7 = arith.addi %6, %1 : vector<4x256xi32>
    %c0 = arith.constant 0 : index
    %8 = memref.load %arg1[%c0] : memref<1xi32, #tpu.memory_space<smem>>
    %c-1640531527_i32 = arith.constant -1640531527 : i32
    %9 = arith.muli %8, %c-1640531527_i32 : i32
    %10 = vector.broadcast %9 : i32 to vector<4x256xi32>
    %11 = arith.xori %7, %10 : vector<4x256xi32>
    %c16_i32 = arith.constant 16 : i32
    %12 = vector.broadcast %c16_i32 : i32 to vector<4x256xi32>
    %13 = arith.shrui %11, %12 : vector<4x256xi32>
    %14 = arith.xori %11, %13 : vector<4x256xi32>
    %c2146121005_i32 = arith.constant 2146121005 : i32
    %15 = vector.broadcast %c2146121005_i32 : i32 to vector<4x256xi32>
    %16 = arith.muli %14, %15 : vector<4x256xi32>
    %c15_i32 = arith.constant 15 : i32
    %17 = vector.broadcast %c15_i32 : i32 to vector<4x256xi32>
    %18 = arith.shrui %16, %17 : vector<4x256xi32>
    %19 = arith.xori %16, %18 : vector<4x256xi32>
    %c-2073254261_i32 = arith.constant -2073254261 : i32
    %20 = vector.broadcast %c-2073254261_i32 : i32 to vector<4x256xi32>
    %21 = arith.muli %19, %20 : vector<4x256xi32>
    %c16_i32_0 = arith.constant 16 : i32
    %22 = vector.broadcast %c16_i32_0 : i32 to vector<4x256xi32>
    %23 = arith.shrui %21, %22 : vector<4x256xi32>
    %24 = arith.xori %21, %23 : vector<4x256xi32>
    %c-1640531527_i32_1 = arith.constant -1640531527 : i32
    %25 = vector.broadcast %c-1640531527_i32_1 : i32 to vector<4x256xi32>
    %26 = arith.addi %24, %25 : vector<4x256xi32>
    %c16_i32_2 = arith.constant 16 : i32
    %27 = vector.broadcast %c16_i32_2 : i32 to vector<4x256xi32>
    %28 = arith.shrui %26, %27 : vector<4x256xi32>
    %29 = arith.xori %26, %28 : vector<4x256xi32>
    %c2146121005_i32_3 = arith.constant 2146121005 : i32
    %30 = vector.broadcast %c2146121005_i32_3 : i32 to vector<4x256xi32>
    %31 = arith.muli %29, %30 : vector<4x256xi32>
    %c15_i32_4 = arith.constant 15 : i32
    %32 = vector.broadcast %c15_i32_4 : i32 to vector<4x256xi32>
    %33 = arith.shrui %31, %32 : vector<4x256xi32>
    %34 = arith.xori %31, %33 : vector<4x256xi32>
    %c-2073254261_i32_5 = arith.constant -2073254261 : i32
    %35 = vector.broadcast %c-2073254261_i32_5 : i32 to vector<4x256xi32>
    %36 = arith.muli %34, %35 : vector<4x256xi32>
    %c16_i32_6 = arith.constant 16 : i32
    %37 = vector.broadcast %c16_i32_6 : i32 to vector<4x256xi32>
    %38 = arith.shrui %36, %37 : vector<4x256xi32>
    %39 = arith.xori %36, %38 : vector<4x256xi32>
    %c8_i32 = arith.constant 8 : i32
    %40 = vector.broadcast %c8_i32 : i32 to vector<4x256xi32>
    %41 = arith.shrui %24, %40 : vector<4x256xi32>
    %42 = arith.sitofp %41 : vector<4x256xi32> to vector<4x256xf32>
    %cst = arith.constant 5.000000e-01 : f32
    %43 = vector.broadcast %cst : f32 to vector<4x256xf32>
    %44 = arith.addf %42, %43 : vector<4x256xf32>
    %cst_7 = arith.constant 5.96046448E-8 : f32
    %45 = vector.broadcast %cst_7 : f32 to vector<4x256xf32>
    %46 = arith.mulf %44, %45 : vector<4x256xf32>
    %c8_i32_8 = arith.constant 8 : i32
    %47 = vector.broadcast %c8_i32_8 : i32 to vector<4x256xi32>
    %48 = arith.shrui %39, %47 : vector<4x256xi32>
    %49 = arith.sitofp %48 : vector<4x256xi32> to vector<4x256xf32>
    %cst_9 = arith.constant 5.000000e-01 : f32
    %50 = vector.broadcast %cst_9 : f32 to vector<4x256xf32>
    %51 = arith.addf %49, %50 : vector<4x256xf32>
    %cst_10 = arith.constant 5.96046448E-8 : f32
    %52 = vector.broadcast %cst_10 : f32 to vector<4x256xf32>
    %53 = arith.mulf %51, %52 : vector<4x256xf32>
    %54 = math.log %46 : vector<4x256xf32>
    %cst_11 = arith.constant -2.000000e+00 : f32
    %55 = vector.broadcast %cst_11 : f32 to vector<4x256xf32>
    %56 = arith.mulf %55, %54 : vector<4x256xf32>
    %57 = math.sqrt %56 : vector<4x256xf32>
    %cst_12 = arith.constant 6.28318548 : f32
    %58 = vector.broadcast %cst_12 : f32 to vector<4x256xf32>
    %59 = arith.mulf %58, %53 : vector<4x256xf32>
    %60 = math.cos %59 : vector<4x256xf32>
    %61 = arith.mulf %57, %60 : vector<4x256xf32>
    %62 = math.sin %59 : vector<4x256xf32>
    %63 = arith.mulf %57, %62 : vector<4x256xf32>
    %64 = tpu.concatenate %61, %63 in 1 : vector<4x256xf32>, vector<4x256xf32> -> vector<4x512xf32>
    %c0_13 = arith.constant 0 : index
    %65 = memref.load %arg2[%c0_13] : memref<1xf32, #tpu.memory_space<smem>>
    %c0_14 = arith.constant 0 : index
    %c0_15 = arith.constant 0 : index
    %66 = vector.load %arg3[%c0_14, %c0_15] : memref<4x512xf32, #tpu.memory_space<vmem>>, vector<4x512xf32>
    %67 = vector.broadcast %65 : f32 to vector<4x512xf32>
    %68 = arith.mulf %67, %64 : vector<4x512xf32>
    %cst_16 = arith.constant 1.000000e+00 : f32
    %69 = vector.broadcast %cst_16 : f32 to vector<4x512xf32>
    %70 = arith.addf %69, %68 : vector<4x512xf32>
    %71 = arith.mulf %66, %70 : vector<4x512xf32>
    %c0_17 = arith.constant 0 : index
    %c0_18 = arith.constant 0 : index
    %72 = vector.load %arg4[%c0_17, %c0_18] : memref<4x512xf32, #tpu.memory_space<vmem>>, vector<4x512xf32>
    tpu.vector_store %arg4[%c0_17, %c0_18], %71 {strides = array<i32>} : memref<4x512xf32, #tpu.memory_space<vmem>>, vector<4x512xf32>,
    return
  }
  func.func @transform_0(%arg0: i32) -> i32 {
    %c0_i32 = arith.constant 0 : i32
    %c0_i32_0 = arith.constant 0 : i32
    return %c0_i32 : i32
  }
  func.func @transform_1(%arg0: i32) -> i32 {
    %c0_i32 = arith.constant 0 : i32
    %c0_i32_0 = arith.constant 0 : i32
    return %c0_i32 : i32
  }
  func.func @transform_2(%arg0: i32) -> (i32, i32) {
    %c0_i32 = arith.constant 0 : i32
    %c0_i32_0 = arith.constant 0 : i32
    return %arg0, %c0_i32 : i32, i32
  }
  func.func @transform_3(%arg0: i32) -> (i32, i32) {
    %c0_i32 = arith.constant 0 : i32
    %c0_i32_0 = arith.constant 0 : i32
    return %arg0, %c0_i32 : i32, i32
  }
}

</mosaic_0001>

<llo_original>
// kernel: tpu_custom_call.1
$region0: #{tpu_custom_call.1}
  #allocation0 [shape = 'u32[]', space=smem, size = 0x4, offset = 0x4, fixed_abs, tag = 'smem constant byte address 0x4 - core index']
  #allocation1 [shape = 'u32[144,128]{1,0:T(1,128)}', space=vmem, size = 0x12000, scoped, tag = 'internal scratch']
  #allocation2 [shape = 's32[1]{0:T(128)S(6)}', space=smem, size = 0x200, scoped, tag = 'scoped memory for tpu_custom_call.1']
  #allocation3 [shape = 'f32[1]{0:T(128)S(6)}', space=smem, size = 0x200, scoped, tag = 'scoped memory for tpu_custom_call.1']
  %s0 = inlined_call_operand.<no memory space> [shape: s32[1], index: 0, kind: input, shape index: {}]
  %s1 = inlined_call_operand.<no memory space> [shape: f32[1], index: 1, kind: input, shape index: {}]
  %s2 = inlined_call_operand.hbm [shape: f32[4,512], index: 2, kind: input, shape index: {}]
  %s3 = inlined_call_operand.hbm [shape: f32[4,512], index: 3, kind: output, shape index: {}]
  %s4 = sld [smem:[#allocation0]]
  $region26: #{tpu_custom_call.1} parent=0
    _
  %s6 = ssub.s32 1, %s4
  %s7 = scalar_select 0, %s6, %s4
  %8 = sst [smem:[#allocation2]] %s0
  %9 = sst [smem:[#allocation3]] %s1
  $region1: #{tpu_custom_call.1} parent=0
    #allocation4 [shape = 'u8[8192]{0}', space=vmem, size = 0x2000, scoped, tag = 'input window, operand 2, single buffered']
    #allocation5 [shape = 's32[1]{0}', space=sflag, size = 0x4, scoped, tag = 'scoped memory for tpu_custom_call.1']
    #allocation6 [shape = 's32[1]{0}', space=sflag, size = 0x4, scoped, tag = 'scoped memory for tpu_custom_call.1']
    #allocation7 [shape = 'u8[8192]{0}', space=vmem, size = 0x2000, scoped, tag = 'output window, operand 0, single buffered']
    %10 = vsyncpa [#allocation5], 0
    %11 = vsyncpa [#allocation6], 0
    // Predicated region
    $region2: #{tpu_custom_call.1} parent=1 // pred_check
      _
    $region3: #{tpu_custom_call.1} parent=1 // pred_check_branch
      %13 = sbr.rel (0) target = $region5
    $region4: #{tpu_custom_call.1} parent=1 // pred_region
      _
    $region5: #{tpu_custom_call.1} parent=1 // pred_fallthru
      _
    // Predicated region
    $region6: #{tpu_custom_call.1} parent=1 // pred_check
      _
    $region7: #{tpu_custom_call.1} parent=1 // pred_check_branch
      %15 = sbr.rel (0) target = $region9
    $region8: #{tpu_custom_call.1} parent=1 // pred_region
      _
    $region9: #{tpu_custom_call.1} parent=1 // pred_fallthru
      _
    // Predicated region
    $region10: #{tpu_custom_call.1} parent=1 // pred_check
      _
    $region11: #{tpu_custom_call.1} parent=1 // pred_check_branch
      %17 = sbr.rel (0) target = $region13
    $region12: #{tpu_custom_call.1} parent=1 // pred_region
      %s19 = ssub.s32 256, 256
      %20 = vsyncadd [#allocation5], %s19
      %s22 = sshll.u32 [#allocation4], 4
      %s23 = int_to_ptr.vmem [resolvable:$true] %s22
      %25 = dma.hbm_to_vmem [thread:$0]  %s2, 256, %s23, [#allocation5]
    $region13: #{tpu_custom_call.1} parent=1 // pred_fallthru
      _
    // Predicated region
    $region14: #{tpu_custom_call.1} parent=1 // pred_check
      _
    $region15: #{tpu_custom_call.1} parent=1 // pred_check_branch
      %27 = sbr.rel (0) target = $region17
    $region16: #{tpu_custom_call.1} parent=1 // pred_region
      %28 = dma.done [#allocation5], 256
    $region17: #{tpu_custom_call.1} parent=1 // pred_fallthru
      _
    %v29 = vlaneseq
    %v30 = vshrl.u32 %v29, 7
    %v31 = vlaneseq
    %v32 = vand.u32 %v31, 127
    %v33 = vadd.s32 %v32, 128
    %s34 = smul.u32 0, 4
    %v35 = vstv %s34
    %v36 = vadd.s32 %v35, %v30
    %v37 = vmul.u32 %v36, 256
    %v38 = vadd.s32 %v37, %v32
    %v39 = vadd.s32 %v37, %v33
    %s40 = sld [smem:[#allocation2]]
    %s41 = smul.u32 %s40, 2654435769
    %v42 = vstv %s41
    %v43 = vxor.u32 %v38, %v42
    %v44 = vxor.u32 %v39, %v42
    %v45 = vshrl.u32 %v43, 16
    %v46 = vshrl.u32 %v44, 16
    %v47 = vxor.u32 %v43, %v45
    %v48 = vxor.u32 %v44, %v46
    %v49 = vmul.u32 %v47, 2146121005
    %v50 = vmul.u32 %v48, 2146121005
    %v51 = vshrl.u32 %v49, 15
    %v52 = vshrl.u32 %v50, 15
    %v53 = vxor.u32 %v49, %v51
    %v54 = vxor.u32 %v50, %v52
    %v55 = vmul.u32 %v53, 2221713035
    %v56 = vmul.u32 %v54, 2221713035
    %v57 = vshrl.u32 %v55, 16
    %v58 = vshrl.u32 %v56, 16
    %v59 = vxor.u32 %v55, %v57
    %v60 = vxor.u32 %v56, %v58
    %v61 = vadd.s32 %v59, 2654435769
    %v62 = vadd.s32 %v60, 2654435769
    %v63 = vshrl.u32 %v61, 16
    %v64 = vshrl.u32 %v62, 16
    %v65 = vxor.u32 %v61, %v63
    %v66 = vxor.u32 %v62, %v64
    %v67 = vmul.u32 %v65, 2146121005
    %v68 = vmul.u32 %v66, 2146121005
    %v69 = vshrl.u32 %v67, 15
    %v70 = vshrl.u32 %v68, 15
    %v71 = vxor.u32 %v67, %v69
    %v72 = vxor.u32 %v68, %v70
    %v73 = vmul.u32 %v71, 2221713035
    %v74 = vmul.u32 %v72, 2221713035
    %v75 = vshrl.u32 %v73, 16
    %v76 = vshrl.u32 %v74, 16
    %v77 = vxor.u32 %v73, %v75
    %v78 = vxor.u32 %v74, %v76
    %v79 = vshrl.u32 %v59, 8
    %v80 = vshrl.u32 %v60, 8
    %v81 = vcvt.s32.f32 %v79
    %v82 = vcvt.s32.f32 %v80
    %v83 = vadd.f32 %v81, 0.5
    %v84 = vadd.f32 %v82, 0.5
    %v85 = vmul.f32 %v83, 5.9604645e-08
    %v86 = vmul.f32 %v84, 5.9604645e-08
    %v87 = vshrl.u32 %v77, 8
    %v88 = vshrl.u32 %v78, 8
    %v89 = vcvt.s32.f32 %v87
    %v90 = vcvt.s32.f32 %v88
    %v91 = vadd.f32 %v89, 0.5
    %v92 = vadd.f32 %v90, 0.5
    %v93 = vmul.f32 %v91, 5.9604645e-08
    %v94 = vmul.f32 %v92, 5.9604645e-08
    %v95 = vlog2.pop %v85
    %v96 = vmul.f32 %v95, 0.6931472
    %v97 = vlog2.pop %v86
    %v98 = vmul.f32 %v97, 0.6931472
    %v99 = vmul.f32 %v96, -2.0
    %v100 = vmul.f32 %v98, -2.0
    %v101 = vrsqrt.pop %v99
    %v102 = vmul.f32 %v99, %v101
    %vm103 = vcmp.eq.f32.partialorder %v99, inf
    %v104 = vsel %vm103, %v99, %v102
    %vm105 = vcmp.eq.f32.partialorder %v99, 0.0
    %v106 = vand.u32 %v99, 2147483648
    %v107 = vsel %vm105, %v106, %v104
    %v108 = vrsqrt.pop %v100
    %v109 = vmul.f32 %v100, %v108
    %vm110 = vcmp.eq.f32.partialorder %v100, inf
    %v111 = vsel %vm110, %v100, %v109
    %vm112 = vcmp.eq.f32.partialorder %v100, 0.0
    %v113 = vand.u32 %v100, 2147483648
    %v114 = vsel %vm112, %v113, %v111
    %v115 = vmul.f32 %v93, 6.2831855
    %v116 = vmul.f32 %v94, 6.2831855
    %v117 = vand.u32 2147483647, %v115
    %vm118 = vcmp.le.f32.partialorder %v117, 0.7853982
    %vm119 = vcmp.lt.s32.totalorder %v115, 0
    %v120 = vand.u32 %v115, 2139095040
    %v121 = vshrl.u32 %v120, 23
    %v122 = vsub.s32 %v121, 127
    %v123 = vand.u32 2147483647, %v115
    %v124 = vand.u32 %v123, 8388607
    %v125 = vor.u32 %v124, 8388608
    %v126 = vsub.s32 0, %v125
    %v127 = vadd.s32 %v122, 1
    %vm128 = vcmp.gt.s32.totalorder %v127, 0
    %v129 = vsel %vm128, %v127, 0
    %v130 = vshrl.u32 %v129, 5
    %v131 = vand.u32 %v129, 31
    %v132 = vsub.s32 32, %v131
    %v133 = vshrl.u32 683565275, %v132
    %v134 = vshll.u32 683565275, %v131
    %v135 = vshrl.u32 2475754826, %v132
    %v136 = vor.u32 %v134, %v135
    %v137 = vshll.u32 2475754826, %v131
    %v138 = vshrl.u32 2131351028, %v132
    %v139 = vor.u32 %v137, %v138
    %v140 = vshll.u32 2131351028, %v131
    %v141 = vshrl.u32 2102212464, %v132
    %v142 = vor.u32 %v140, %v141
    %v143 = vshll.u32 2102212464, %v131
    %v144 = vshrl.u32 920167782, %v132
    %v145 = vor.u32 %v143, %v144
    %v146 = vshll.u32 920167782, %v131
    %v147 = vshrl.u32 1326507024, %v132
    %v148 = vor.u32 %v146, %v147
    %vm149 = vcmp.lt.s32.totalorder %v130, 1
    %vm150 = vcmp.lt.s32.totalorder %v130, 2
    %vm151 = vcmp.lt.s32.totalorder %v130, 3
    %vm152 = vcmp.lt.s32.totalorder %v130, 4
    %v153 = vsel %vm149, %v133, %v136
    %v154 = vsel %vm152, %v142, 2102212464
    %v155 = vsel %vm151, %v139, %v154
    %v156 = vsel %vm150, %v153, %v155
    %v157 = vsel %vm149, %v136, %v139
    %v158 = vsel %vm152, %v145, 920167782
    %v159 = vsel %vm151, %v142, %v158
    %v160 = vsel %vm150, %v157, %v159
    %v161 = vsel %vm149, %v139, %v142
    %v162 = vsel %vm152, %v148, 1326507024
    %v163 = vsel %vm151, %v145, %v162
    %v164 = vsel %vm150, %v161, %v163
    %v165 = vshll.u32 %v125, 8
    %v166 = vmul.u32.u64.compose %v165, %v164
    %v167 = vextract.low.u32 %v166
    %v168 = vextract.high.u32 %v166
    %v169 = vmul.u32.u64.compose %v165, %v160
    %v170 = vextract.low.u32 %v169
    %v171 = vextract.high.u32 %v169
    %v172 = vmul.u32 %v165, %v156
    %v173 = vadd.s32 %v168, %v170
    %vm174 = vc.u32 %v168, %v170
    %v175 = vadd.s32 %v171, 1
    %v176 = vsel %vm174, %v175, %v171
    %v177 = vadd.s32 %v172, %v176
    %v178 = vadd.s32 %v177, 536870912
    %v179 = vshrl.u32 %v178, 30
    %v180 = vshll.u32 %v179, 30
    %v181 = vsub.s32 %v177, %v180
    %vm182 = vcmp.lt.s32.totalorder %v181, 0
    %v183 = vsub.s32 0, %v181
    %v184 = vsel %vm182, %v183, %v181
    %v185 = vclz %v184
    %v186 = vsub.s32 %v185, 2
    %vm187 = vcmp.gt.s32.totalorder 0, %v186
    %v188 = vsel %vm187, 0, %v186
    %v189 = vsub.s32 32, %v188
    %v190 = vshll.u32 %v181, %v188
    %v191 = vshrl.u32 %v173, %v189
    %v192 = vor.u32 %v190, %v191
    %v193 = vsub.s32 4294967266, %v188
    %v194 = vadd.s32 %v193, 127
    %v195 = vshll.u32 %v194, 23
    %v196 = vor.u32 4788187, %v195
    %v197 = vand.u32 2147483647, %v196
    %v199 = vcvt.s32.f32 %v192
    %v200 = vmul.f32 %v199, %v197
    %v201 = vxor.u32 %v200, 2147483648
    %v202 = vsel %vm119, %v201, %v200
    %v203 = vsub.s32 4, %v179
    %v204 = vsel %vm119, %v203, %v179
    %v205 = vsel %vm118, %v115, %v202
    %v206 = vsel %vm118, 0, %v204
    %v207 = vcosq.f32.pop %v205
    %v208 = vsinq.f32.pop %v205
    %vm209 = vweird.f32 %v115
    %v210 = vand.u32 %v206, 3
    %vm211 = vcmp.lt.s32.totalorder %v210, 2
    %vm212 = vcmp.eq.s32.totalorder %v210, 0
    %v213 = vxor.u32 %v208, 2147483648
    %v214 = vsel %vm212, %v207, %v213
    %vm215 = vcmp.eq.s32.totalorder %v210, 2
    %v216 = vxor.u32 %v207, 2147483648
    %v217 = vsel %vm215, %v216, %v208
    %v218 = vsel %vm211, %v214, %v217
    %v219 = vsel %vm209, nan, %v218
    %v220 = vand.u32 2147483647, %v116
    %vm221 = vcmp.le.f32.partialorder %v220, 0.7853982
    %vm222 = vcmp.lt.s32.totalorder %v116, 0
    %v223 = vand.u32 %v116, 2139095040
    %v224 = vshrl.u32 %v223, 23
    %v225 = vsub.s32 %v224, 127
    %v226 = vand.u32 2147483647, %v116
    %v227 = vand.u32 %v226, 8388607
    %v228 = vor.u32 %v227, 8388608
    %v229 = vsub.s32 0, %v228
    %v230 = vadd.s32 %v225, 1
    %vm231 = vcmp.gt.s32.totalorder %v230, 0
    %v232 = vsel %vm231, %v230, 0
    %v233 = vshrl.u32 %v232, 5
    %v234 = vand.u32 %v232, 31
    %v235 = vsub.s32 32, %v234
    %v236 = vshrl.u32 683565275, %v235
    %v237 = vshll.u32 683565275, %v234
    %v238 = vshrl.u32 2475754826, %v235
    %v239 = vor.u32 %v237, %v238
    %v240 = vshll.u32 2475754826, %v234
    %v241 = vshrl.u32 2131351028, %v235
    %v242 = vor.u32 %v240, %v241
    %v243 = vshll.u32 2131351028, %v234
    %v244 = vshrl.u32 2102212464, %v235
    %v245 = vor.u32 %v243, %v244
    %v246 = vshll.u32 2102212464, %v234
    %v247 = vshrl.u32 920167782, %v235
    %v248 = vor.u32 %v246, %v247
    %v249 = vshll.u32 920167782, %v234
    %v250 = vshrl.u32 1326507024, %v235
    %v251 = vor.u32 %v249, %v250
    %vm252 = vcmp.lt.s32.totalorder %v233, 1
    %vm253 = vcmp.lt.s32.totalorder %v233, 2
    %vm254 = vcmp.lt.s32.totalorder %v233, 3
    %vm255 = vcmp.lt.s32.totalorder %v233, 4
    %v256 = vsel %vm252, %v236, %v239
    %v257 = vsel %vm255, %v245, 2102212464
    %v258 = vsel %vm254, %v242, %v257
    %v259 = vsel %vm253, %v256, %v258
    %v260 = vsel %vm252, %v239, %v242
    %v261 = vsel %vm255, %v248, 920167782
    %v262 = vsel %vm254, %v245, %v261
    %v263 = vsel %vm253, %v260, %v262
    %v264 = vsel %vm252, %v242, %v245
    %v265 = vsel %vm255, %v251, 1326507024
    %v266 = vsel %vm254, %v248, %v265
    %v267 = vsel %vm253, %v264, %v266
    %v268 = vshll.u32 %v228, 8
    %v269 = vmul.u32.u64.compose %v268, %v267
    %v270 = vextract.low.u32 %v269
    %v271 = vextract.high.u32 %v269
    %v272 = vmul.u32.u64.compose %v268, %v263
    %v273 = vextract.low.u32 %v272
    %v274 = vextract.high.u32 %v272
    %v275 = vmul.u32 %v268, %v259
    %v276 = vadd.s32 %v271, %v273
    %vm277 = vc.u32 %v271, %v273
    %v278 = vadd.s32 %v274, 1
    %v279 = vsel %vm277, %v278, %v274
    %v280 = vadd.s32 %v275, %v279
    %v281 = vadd.s32 %v280, 536870912
    %v282 = vshrl.u32 %v281, 30
    %v283 = vshll.u32 %v282, 30
    %v284 = vsub.s32 %v280, %v283
    %vm285 = vcmp.lt.s32.totalorder %v284, 0
    %v286 = vsub.s32 0, %v284
    %v287 = vsel %vm285, %v286, %v284
    %v288 = vclz %v287
    %v289 = vsub.s32 %v288, 2
    %vm290 = vcmp.gt.s32.totalorder 0, %v289
    %v291 = vsel %vm290, 0, %v289
    %v292 = vsub.s32 32, %v291
    %v293 = vshll.u32 %v284, %v291
    %v294 = vshrl.u32 %v276, %v292
    %v295 = vor.u32 %v293, %v294
    %v296 = vsub.s32 4294967266, %v291
    %v297 = vadd.s32 %v296, 127
    %v298 = vshll.u32 %v297, 23
    %v299 = vor.u32 4788187, %v298
    %v300 = vand.u32 2147483647, %v299
    %v302 = vcvt.s32.f32 %v295
    %v303 = vmul.f32 %v302, %v300
    %v304 = vxor.u32 %v303, 2147483648
    %v305 = vsel %vm222, %v304, %v303
    %v306 = vsub.s32 4, %v282
    %v307 = vsel %vm222, %v306, %v282
    %v308 = vsel %vm221, %v116, %v305
    %v309 = vsel %vm221, 0, %v307
    %v310 = vcosq.f32.pop %v308
    %v311 = vsinq.f32.pop %v308
    %vm312 = vweird.f32 %v116
    %v313 = vand.u32 %v309, 3
    %vm314 = vcmp.lt.s32.totalorder %v313, 2
    %vm315 = vcmp.eq.s32.totalorder %v313, 0
    %v316 = vxor.u32 %v311, 2147483648
    %v317 = vsel %vm315, %v310, %v316
    %vm318 = vcmp.eq.s32.totalorder %v313, 2
    %v319 = vxor.u32 %v310, 2147483648
    %v320 = vsel %vm318, %v319, %v311
    %v321 = vsel %vm314, %v317, %v320
    %v322 = vsel %vm312, nan, %v321
    %v323 = vmul.f32 %v107, %v219
    %v324 = vmul.f32 %v114, %v322
    %v325 = vand.u32 2147483647, %v115
    %vm326 = vcmp.le.f32.partialorder %v325, 0.7853982
    %vm327 = vcmp.lt.s32.totalorder %v115, 0
    %v328 = vand.u32 %v115, 2139095040
    %v329 = vshrl.u32 %v328, 23
    %v330 = vsub.s32 %v329, 127
    %v331 = vand.u32 2147483647, %v115
    %v332 = vand.u32 %v331, 8388607
    %v333 = vor.u32 %v332, 8388608
    %v334 = vsub.s32 0, %v333
    %v335 = vadd.s32 %v330, 1
    %vm336 = vcmp.gt.s32.totalorder %v335, 0
    %v337 = vsel %vm336, %v335, 0
    %v338 = vshrl.u32 %v337, 5
    %v339 = vand.u32 %v337, 31
    %v340 = vsub.s32 32, %v339
    %v341 = vshrl.u32 683565275, %v340
    %v342 = vshll.u32 683565275, %v339
    %v343 = vshrl.u32 2475754826, %v340
    %v344 = vor.u32 %v342, %v343
    %v345 = vshll.u32 2475754826, %v339
    %v346 = vshrl.u32 2131351028, %v340
    %v347 = vor.u32 %v345, %v346
    %v348 = vshll.u32 2131351028, %v339
    %v349 = vshrl.u32 2102212464, %v340
    %v350 = vor.u32 %v348, %v349
    %v351 = vshll.u32 2102212464, %v339
    %v352 = vshrl.u32 920167782, %v340
    %v353 = vor.u32 %v351, %v352
    %v354 = vshll.u32 920167782, %v339
    %v355 = vshrl.u32 1326507024, %v340
    %v356 = vor.u32 %v354, %v355
    %vm357 = vcmp.lt.s32.totalorder %v338, 1
    %vm358 = vcmp.lt.s32.totalorder %v338, 2
    %vm359 = vcmp.lt.s32.totalorder %v338, 3
    %vm360 = vcmp.lt.s32.totalorder %v338, 4
    %v361 = vsel %vm357, %v341, %v344
    %v362 = vsel %vm360, %v350, 2102212464
    %v363 = vsel %vm359, %v347, %v362
    %v364 = vsel %vm358, %v361, %v363
    %v365 = vsel %vm357, %v344, %v347
    %v366 = vsel %vm360, %v353, 920167782
    %v367 = vsel %vm359, %v350, %v366
    %v368 = vsel %vm358, %v365, %v367
    %v369 = vsel %vm357, %v347, %v350
    %v370 = vsel %vm360, %v356, 1326507024
    %v371 = vsel %vm359, %v353, %v370
    %v372 = vsel %vm358, %v369, %v371
    %v373 = vshll.u32 %v333, 8
    %v374 = vmul.u32.u64.compose %v373, %v372
    %v375 = vextract.low.u32 %v374
    %v376 = vextract.high.u32 %v374
    %v377 = vmul.u32.u64.compose %v373, %v368
    %v378 = vextract.low.u32 %v377
    %v379 = vextract.high.u32 %v377
    %v380 = vmul.u32 %v373, %v364
    %v381 = vadd.s32 %v376, %v378
    %vm382 = vc.u32 %v376, %v378
    %v383 = vadd.s32 %v379, 1
    %v384 = vsel %vm382, %v383, %v379
    %v385 = vadd.s32 %v380, %v384
    %v386 = vadd.s32 %v385, 536870912
    %v387 = vshrl.u32 %v386, 30
    %v388 = vshll.u32 %v387, 30
    %v389 = vsub.s32 %v385, %v388
    %vm390 = vcmp.lt.s32.totalorder %v389, 0
    %v391 = vsub.s32 0, %v389
    %v392 = vsel %vm390, %v391, %v389
    %v393 = vclz %v392
    %v394 = vsub.s32 %v393, 2
    %vm395 = vcmp.gt.s32.totalorder 0, %v394
    %v396 = vsel %vm395, 0, %v394
    %v397 = vsub.s32 32, %v396
    %v398 = vshll.u32 %v389, %v396
    %v399 = vshrl.u32 %v381, %v397
    %v400 = vor.u32 %v398, %v399
    %v401 = vsub.s32 4294967266, %v396
    %v402 = vadd.s32 %v401, 127
    %v403 = vshll.u32 %v402, 23
    %v404 = vor.u32 4788187, %v403
    %v405 = vand.u32 2147483647, %v404
    %v407 = vcvt.s32.f32 %v400
    %v408 = vmul.f32 %v407, %v405
    %v409 = vxor.u32 %v408, 2147483648
    %v410 = vsel %vm327, %v409, %v408
    %v411 = vsub.s32 4, %v387
    %v412 = vsel %vm327, %v411, %v387
    %v413 = vsel %vm326, %v115, %v410
    %v414 = vsel %vm326, 0, %v412
    %v415 = vcosq.f32.pop %v413
    %v416 = vsinq.f32.pop %v413
    %vm417 = vweird.f32 %v115
    %v418 = vadd.s32 %v414, 3
    %v419 = vand.u32 %v418, 3
    %vm420 = vcmp.lt.s32.totalorder %v419, 2
    %vm421 = vcmp.eq.s32.totalorder %v419, 0
    %v422 = vxor.u32 %v416, 2147483648
    %v423 = vsel %vm421, %v415, %v422
    %vm424 = vcmp.eq.s32.totalorder %v419, 2
    %v425 = vxor.u32 %v415, 2147483648
    %v426 = vsel %vm424, %v425, %v416
    %v427 = vsel %vm420, %v423, %v426
    %v428 = vsel %vm417, nan, %v427
    %v429 = vand.u32 2147483647, %v116
    %vm430 = vcmp.le.f32.partialorder %v429, 0.7853982
    %vm431 = vcmp.lt.s32.totalorder %v116, 0
    %v432 = vand.u32 %v116, 2139095040
    %v433 = vshrl.u32 %v432, 23
    %v434 = vsub.s32 %v433, 127
    %v435 = vand.u32 2147483647, %v116
    %v436 = vand.u32 %v435, 8388607
    %v437 = vor.u32 %v436, 8388608
    %v438 = vsub.s32 0, %v437
    %v439 = vadd.s32 %v434, 1
    %vm440 = vcmp.gt.s32.totalorder %v439, 0
    %v441 = vsel %vm440, %v439, 0
    %v442 = vshrl.u32 %v441, 5
    %v443 = vand.u32 %v441, 31
    %v444 = vsub.s32 32, %v443
    %v445 = vshrl.u32 683565275, %v444
    %v446 = vshll.u32 683565275, %v443
    %v447 = vshrl.u32 2475754826, %v444
    %v448 = vor.u32 %v446, %v447
    %v449 = vshll.u32 2475754826, %v443
    %v450 = vshrl.u32 2131351028, %v444
    %v451 = vor.u32 %v449, %v450
    %v452 = vshll.u32 2131351028, %v443
    %v453 = vshrl.u32 2102212464, %v444
    %v454 = vor.u32 %v452, %v453
    %v455 = vshll.u32 2102212464, %v443
    %v456 = vshrl.u32 920167782, %v444
    %v457 = vor.u32 %v455, %v456
    %v458 = vshll.u32 920167782, %v443
    %v459 = vshrl.u32 1326507024, %v444
    %v460 = vor.u32 %v458, %v459
    %vm461 = vcmp.lt.s32.totalorder %v442, 1
    %vm462 = vcmp.lt.s32.totalorder %v442, 2
    %vm463 = vcmp.lt.s32.totalorder %v442, 3
    %vm464 = vcmp.lt.s32.totalorder %v442, 4
    %v465 = vsel %vm461, %v445, %v448
    %v466 = vsel %vm464, %v454, 2102212464
    %v467 = vsel %vm463, %v451, %v466
    %v468 = vsel %vm462, %v465, %v467
    %v469 = vsel %vm461, %v448, %v451
    %v470 = vsel %vm464, %v457, 920167782
    %v471 = vsel %vm463, %v454, %v470
    %v472 = vsel %vm462, %v469, %v471
    %v473 = vsel %vm461, %v451, %v454
    %v474 = vsel %vm464, %v460, 1326507024
    %v475 = vsel %vm463, %v457, %v474
    %v476 = vsel %vm462, %v473, %v475
    %v477 = vshll.u32 %v437, 8
    %v478 = vmul.u32.u64.compose %v477, %v476
    %v479 = vextract.low.u32 %v478
    %v480 = vextract.high.u32 %v478
    %v481 = vmul.u32.u64.compose %v477, %v472
    %v482 = vextract.low.u32 %v481
    %v483 = vextract.high.u32 %v481
    %v484 = vmul.u32 %v477, %v468
    %v485 = vadd.s32 %v480, %v482
    %vm486 = vc.u32 %v480, %v482
    %v487 = vadd.s32 %v483, 1
    %v488 = vsel %vm486, %v487, %v483
    %v489 = vadd.s32 %v484, %v488
    %v490 = vadd.s32 %v489, 536870912
    %v491 = vshrl.u32 %v490, 30
    %v492 = vshll.u32 %v491, 30
    %v493 = vsub.s32 %v489, %v492
    %vm494 = vcmp.lt.s32.totalorder %v493, 0
    %v495 = vsub.s32 0, %v493
    %v496 = vsel %vm494, %v495, %v493
    %v497 = vclz %v496
    %v498 = vsub.s32 %v497, 2
    %vm499 = vcmp.gt.s32.totalorder 0, %v498
    %v500 = vsel %vm499, 0, %v498
    %v501 = vsub.s32 32, %v500
    %v502 = vshll.u32 %v493, %v500
    %v503 = vshrl.u32 %v485, %v501
    %v504 = vor.u32 %v502, %v503
    %v505 = vsub.s32 4294967266, %v500
    %v506 = vadd.s32 %v505, 127
    %v507 = vshll.u32 %v506, 23
    %v508 = vor.u32 4788187, %v507
    %v509 = vand.u32 2147483647, %v508
    %v511 = vcvt.s32.f32 %v504
    %v512 = vmul.f32 %v511, %v509
    %v513 = vxor.u32 %v512, 2147483648
    %v514 = vsel %vm431, %v513, %v512
    %v515 = vsub.s32 4, %v491
    %v516 = vsel %vm431, %v515, %v491
    %v517 = vsel %vm430, %v116, %v514
    %v518 = vsel %vm430, 0, %v516
    %v519 = vcosq.f32.pop %v517
    %v520 = vsinq.f32.pop %v517
    %vm521 = vweird.f32 %v116
    %v522 = vadd.s32 %v518, 3
    %v523 = vand.u32 %v522, 3
    %vm524 = vcmp.lt.s32.totalorder %v523, 2
    %vm525 = vcmp.eq.s32.totalorder %v523, 0
    %v526 = vxor.u32 %v520, 2147483648
    %v527 = vsel %vm525, %v519, %v526
    %vm528 = vcmp.eq.s32.totalorder %v523, 2
    %v529 = vxor.u32 %v519, 2147483648
    %v530 = vsel %vm528, %v529, %v520
    %v531 = vsel %vm524, %v527, %v530
    %v532 = vsel %vm521, nan, %v531
    %v533 = vmul.f32 %v107, %v428
    %v534 = vmul.f32 %v114, %v532
    %s535 = sld [smem:[#allocation3]]
    %v536 = vld [vmem:[#allocation4] sm:$0xff]
    %v537 = vld [vmem:[#allocation4 + $0x8] sm:$0xff]
    %v538 = vstv %s535
    %v539 = vmul.f32 %v538, %v323
    %v540 = vmul.f32 %v538, %v324
    %v541 = vmul.f32 %v538, %v533
    %v542 = vmul.f32 %v538, %v534
    %v543 = vadd.f32 %v539, 1.0
    %v544 = vadd.f32 %v540, 1.0
    %v545 = vadd.f32 %v541, 1.0
    %v546 = vadd.f32 %v542, 1.0
    %v551 = vcombine.low %v543, %v544
    %v552 = vcombine.low %v545, %v546
    %v555 = vmul.f32 %v536, %v551
    %v556 = vmul.f32 %v537, %v552
    %557 = vst [vmem:[#allocation7] sm:$0xff] %v555
    %558 = vst [vmem:[#allocation7 + $0x8] sm:$0xff] %v556
    // Predicated region
    $region18: #{tpu_custom_call.1} parent=1 // pred_check
      _
    $region19: #{tpu_custom_call.1} parent=1 // pred_check_branch
      %560 = sbr.rel (0) target = $region21
    $region20: #{tpu_custom_call.1} parent=1 // pred_region
      %s562 = ssub.s32 256, 256
      %563 = vsyncadd [#allocation6], %s562
      %s565 = sshll.u32 [#allocation7], 4
      %s566 = int_to_ptr.vmem [resolvable:$true] %s565
      %568 = dma.vmem_to_hbm [thread:$0]  %s566, 256, %s3, [#allocation6]
    $region21: #{tpu_custom_call.1} parent=1 // pred_fallthru
      _
    // Predicated region
    $region22: #{tpu_custom_call.1} parent=1 // pred_check
      _
    $region23: #{tpu_custom_call.1} parent=1 // pred_check_branch
      %570 = sbr.rel (0) target = $region25
    $region24: #{tpu_custom_call.1} parent=1 // pred_region
      %571 = dma.done [#allocation6], 256
    $region25: #{tpu_custom_call.1} parent=1 // pred_fallthru
      _
    %572 = vsyncpa [#allocation5], 1
    %573 = vsyncpa [#allocation6], 1

</llo_original>
